<compile_context>
chip_gen: v6e
topology: v6e:2x2x1
jax: 0.10.0
libtpu: 0.0.40
codegen_flags: <defaults>
</compile_context>

<pallas_src>
import functools

import jax
import jax.numpy as jnp
import numpy as np
from jax import lax
from jax.experimental import pallas as pl
from jax.experimental.pallas import tpu as pltpu


def _round_up(a, b):
    return -(-a // b) * b


def _round_down(a, b):
    return a // b * b


def _cdiv(a, b):
    return -(-a // b)


# ------------------------------- kernels -------------------------------------
def _cyclic_kernel(x_ref, o_ref, *, wrap_length, row_chunk):
    rows_blk, L = x_ref.shape
    n = wrap_length // L + 1          # full copies of x in the output
    mod = wrap_length % L
    n_chunks = rows_blk // row_chunk  # static: tile_r is a multiple of row_chunk

    def copy_rows(rows):
        x = x_ref[rows, :]
        # Every L-aligned output segment equals roll(x, mod, axis=-1); do the
        # cross-lane shuffle once per chunk (XLU slot), then plain stores.
        rolled = pltpu.roll(x, shift=mod, axis=1) if mod else x
        for j in range(n):            # static trip count
            o_ref[rows, j * L:(j + 1) * L] = rolled
        if mod:
            o_ref[rows, n * L:] = rolled[:, :mod]

    if n_chunks == 1:
        copy_rows(slice(None))
    else:
        def body(c, carry):
            r0 = pl.multiple_of(c * row_chunk, row_chunk)
            copy_rows(pl.ds(r0, row_chunk))
            return carry
        lax.fori_loop(0, n_chunks, body, 0, unroll=True)


def _zero_kernel(x_ref, o_ref, *, wrap_length, row_chunk):
    # TODO(synk): standalone zero mode is exactly lax.pad (already at HBM
    # roofline in XLA); kernel kept for parity / fusion with adjacent work.
    rows_blk = x_ref.shape[0]
    n_chunks = rows_blk // row_chunk

    if n_chunks == 1:
        if wrap_length > 0:
            o_ref[:, :wrap_length] = jnp.zeros((rows_blk, wrap_length), o_ref.dtype)
        o_ref[:, wrap_length:] = x_ref[:, :]
    else:
        zeros_chunk = (jnp.zeros((row_chunk, wrap_length), o_ref.dtype)
                       if wrap_length > 0 else None)   # hoisted out of the loop

        def body(c, carry):
            r0 = pl.multiple_of(c * row_chunk, row_chunk)
            rows = pl.ds(r0, row_chunk)
            if wrap_length > 0:
                o_ref[rows, :wrap_length] = zeros_chunk
            o_ref[rows, wrap_length:] = x_ref[rows, :]
            return carry
        lax.fori_loop(0, n_chunks, body, 0, unroll=True)


# ----------------------------- reference path --------------------------------
def _reference_impl(x, wrap_length, mode):
    """Pure-JAX path (== PyTorch forward). Also the narrow-shape fallback."""
    if mode == "cyclic":
        L = x.shape[2]
        n = wrap_length // L + 1
        mod = wrap_length % L
        parts = ([x[:, :, L - mod:]] if mod else []) + [x] * n
        return jnp.concatenate(parts, axis=2) if len(parts) > 1 else x
    zeros = jnp.zeros(x.shape[:2] + (wrap_length,), dtype=x.dtype)
    return jnp.concatenate([zeros, x], axis=2)


# -------------------------------- wrapper -------------------------------------
_MIN_LANE_BYTES = 512          # below this, XLA handles the narrow rows better
_CHUNK_BYTES = 256 * 1024      # in+out bytes handled per in-kernel chunk
_MAX_CHUNKS_PER_BLOCK = 16     # bounds the unrolled in-kernel loop
_MIN_GRID_STEPS = 4            # >= 2x TensorCores (v7x) when R is large enough


def symmetry_padding(x, wrap_length, mode="cyclic"):
    """Pallas TPU implementation of SymmetryPadding.forward. x: (B, C, L)."""
    if mode not in ("cyclic", "zero"):
        raise ValueError(f"unknown mode: {mode}")

    B, C, L = x.shape
    L_out = L + wrap_length
    R = B * C
    itemsize = jnp.dtype(x.dtype).itemsize

    # Narrow rows get lane-padded to 128 in VMEM and DMA as short strided
    # transfers; tiny R can't even fill a sublane group. XLA is at roofline
    # for those shapes, so fall back.
    if L * itemsize < _MIN_LANE_BYTES or R < 8:
        return _reference_impl(x, wrap_length, mode)

    x2 = x.reshape(R, L)

    sublane = {4: 8, 2: 16, 1: 32}.get(itemsize, 8)
    row_bytes = (L + L_out) * itemsize

    # Rows per in-kernel chunk: ~_CHUNK_BYTES of in+out data, aligned to the
    # dtype's sublane packing, never more rows than the array has.
    chunk_rows = _round_up(max(1, _CHUNK_BYTES // row_bytes), sublane)
    chunk_rows = min(chunk_rows, max(8, _round_down(R, 8)))

    # Generation-aware block budget: the resident set is ~2x (in + out) block
    # (double buffering), keep it around 1/4 of physical VMEM.
    try:
        vmem_bytes = pltpu.get_tpu_info().vmem_capacity_bytes
    except Exception:
        vmem_bytes = 64 * 1024 * 1024          # v7x floor; safe everywhere
    block_budget = vmem_bytes // 8

    n_chunks = max(1, min(_MAX_CHUNKS_PER_BLOCK,
                          block_budget // (chunk_rows * row_bytes)))
    tile_r = chunk_rows * n_chunks
    tile_r = min(tile_r, max(chunk_rows, _round_down(R, chunk_rows)))
    if R >= 2 * chunk_rows:
        # Keep several grid steps so v7x's second TensorCore isn't idle.
        tile_r = min(tile_r, max(chunk_rows,
                                 _round_up(_cdiv(R, _MIN_GRID_STEPS), chunk_rows)))
    grid = (_cdiv(R, tile_r),)   # ragged last block: OOB writes are discarded

    kernel_fn = _cyclic_kernel if mode == "cyclic" else _zero_kernel
    kernel = functools.partial(kernel_fn, wrap_length=wrap_length,
                               row_chunk=chunk_rows)

    out2 = pl.pallas_call(
        kernel,
        out_shape=jax.ShapeDtypeStruct((R, L_out), x.dtype),
        grid_spec=pltpu.PrefetchScalarGridSpec(
            num_scalar_prefetch=0,
            grid=grid,
            in_specs=[pl.BlockSpec((tile_r, L), lambda i: (i, 0))],
            out_specs=pl.BlockSpec((tile_r, L_out), lambda i: (i, 0)),
        ),
        compiler_params=pltpu.CompilerParams(
            dimension_semantics=("parallel",),
            vmem_limit_bytes=min(vmem_bytes // 2, 64 * 1024 * 1024),
        ),
    )(x2)

    return out2.reshape(B, C, L_out)


# ------------------------------- self-test ------------------------------------
if __name__ == "__main__":
    key = jax.random.PRNGKey(0)

    cases = [
        # (B, C, L, wrap_length, mode, dtype)  -- Pallas path (L*itemsize >= 512)
        (2, 4, 256, 37, "cyclic", jnp.float32),    # mod != 0
        (2, 4, 256, 256, "cyclic", jnp.float32),   # mod == 0, one extra full copy
        (2, 4, 256, 300, "cyclic", jnp.float32),   # multiple wraps + tail
        (2, 4, 256, 0, "cyclic", jnp.float32),     # no-op wrap
        (2, 4, 256, 64, "zero", jnp.float32),      # TCN left zero pad
        (3, 5, 256, 37, "cyclic", jnp.float32),    # ragged R (15 rows)
        (8, 32, 512, 128, "cyclic", jnp.float32),  # multi-step grid
        (2, 4, 256, 37, "cyclic", jnp.bfloat16),   # sub-32-bit dtype
        (2, 4, 256, 64, "zero", jnp.bfloat16),
        # Narrow-L shapes route to the XLA fallback (checked for parity).
        (2, 4, 16, 5, "cyclic", jnp.float32),
        (2, 4, 16, 32, "cyclic", jnp.float32),
        (2, 4, 16, 7, "zero", jnp.float32),
        (2, 4, 16, 0, "zero", jnp.float32),
    ]

    for B, C, L, wrap_length, mode, dtype in cases:
        key, sub = jax.random.split(key)
        x = jax.random.normal(sub, (B, C, L), dtype=jnp.float32).astype(dtype)
        out = jax.block_until_ready(symmetry_padding(x, wrap_length, mode))
        ref = _reference_impl(x, wrap_length, mode)
        assert out.shape == (B, C, L + wrap_length), (out.shape, wrap_length, mode)
        np.testing.assert_array_equal(
            np.asarray(out.astype(jnp.float32)),
            np.asarray(ref.astype(jnp.float32)),
        )

    print("KERNEL_OK")
</pallas_src>

<mosaic_0001>
module attributes {stable_mosaic.version = 11 : i64} {
  func.func @_cyclic_kernel(%arg0: i32, %arg1: memref<8x256xf32, #tpu.memory_space<vmem>>, %arg2: memref<8x293xf32, #tpu.memory_space<vmem>>) attributes {dimension_semantics = [#tpu.dimension_semantics<parallel>], iteration_bounds = array<i64: 1>, scalar_prefetch = 0 : i64, scratch_operands = 0 : i64, tpu.core_type = #tpu.core_type<tc>, window_params = [{transform_indices = @transform_0, window_bounds = array<i64: 8, 256>}, {transform_indices = @transform_1, window_bounds = array<i64: 8, 293>}]} {
    %c0 = arith.constant 0 : index
    %c0_0 = arith.constant 0 : index
    %0 = vector.load %arg1[%c0, %c0_0] : memref<8x256xf32, #tpu.memory_space<vmem>>, vector<8x256xf32>
    %c37_i32 = arith.constant 37 : i32
    %1 = tpu.dynamic_rotate %0 by %c37_i32 dim 1 : vector<8x256xf32>, i32 -> vector<8x256xf32>
    %c0_1 = arith.constant 0 : index
    %c0_2 = arith.constant 0 : index
    %2 = vector.load %arg2[%c0_1, %c0_2] : memref<8x293xf32, #tpu.memory_space<vmem>>, vector<8x256xf32>
    tpu.vector_store %arg2[%c0_1, %c0_2], %1 {strides = array<i32>} : memref<8x293xf32, #tpu.memory_space<vmem>>, vector<8x256xf32>,
    %3 = vector.extract_strided_slice %1 {offsets = [0, 0], sizes = [8, 37], strides = [1, 1]} : vector<8x256xf32> to vector<8x37xf32>
    %c0_3 = arith.constant 0 : index
    %c256 = arith.constant 256 : index
    %4 = vector.load %arg2[%c0_3, %c256] : memref<8x293xf32, #tpu.memory_space<vmem>>, vector<8x37xf32>
    tpu.vector_store %arg2[%c0_3, %c256], %3 {strides = array<i32>} : memref<8x293xf32, #tpu.memory_space<vmem>>, vector<8x37xf32>,
    return
  }
  func.func @transform_0(%arg0: i32) -> (i32, i32) {
    %c0_i32 = arith.constant 0 : i32
    %c0_i32_0 = arith.constant 0 : i32
    return %arg0, %c0_i32 : i32, i32
  }
  func.func @transform_1(%arg0: i32) -> (i32, i32) {
    %c0_i32 = arith.constant 0 : i32
    %c0_i32_0 = arith.constant 0 : i32
    return %arg0, %c0_i32 : i32, i32
  }
}

</mosaic_0001>

<llo_original>
// kernel: tpu_custom_call.1
$region0: #{tpu_custom_call.1}
  #allocation0 [shape = 'u32[]', space=smem, size = 0x4, offset = 0x4, fixed_abs, tag = 'smem constant byte address 0x4 - core index']
  #allocation1 [shape = 'u32[144,128]{1,0:T(1,128)}', space=vmem, size = 0x12000, scoped, tag = 'internal scratch']
  %s0 = inlined_call_operand.hbm [shape: f32[8,256], index: 0, kind: input, shape index: {}]
  %s1 = inlined_call_operand.hbm [shape: f32[8,293], index: 1, kind: output, shape index: {}]
  %s2 = sld [smem:[#allocation0]]
  $region18: #{tpu_custom_call.1} parent=0
    _
  %s4 = ssub.s32 1, %s2
  %s5 = scalar_select 0, %s4, %s2
  $region1: #{tpu_custom_call.1} parent=0
    #allocation2 [shape = 'u8[8192]{0}', space=vmem, size = 0x2000, scoped, tag = 'input window, operand 0, single buffered']
    #allocation3 [shape = 's32[1]{0}', space=sflag, size = 0x4, scoped, tag = 'scoped memory for tpu_custom_call.1']
    #allocation4 [shape = 's32[1]{0}', space=sflag, size = 0x4, scoped, tag = 'scoped memory for tpu_custom_call.1']
    #allocation5 [shape = 'u8[12288]{0}', space=vmem, size = 0x3000, scoped, tag = 'output window, operand 0, single buffered']
    %6 = vsyncpa [#allocation3], 0
    %7 = vsyncpa [#allocation4], 0
    // Predicated region
    $region2: #{tpu_custom_call.1} parent=1 // pred_check
      _
    $region3: #{tpu_custom_call.1} parent=1 // pred_check_branch
      %9 = sbr.rel (0) target = $region5
    $region4: #{tpu_custom_call.1} parent=1 // pred_region
      %s11 = ssub.s32 256, 256
      %12 = vsyncadd [#allocation3], %s11
      %s14 = sshll.u32 [#allocation2], 4
      %s15 = int_to_ptr.vmem [resolvable:$true] %s14
      %17 = dma.hbm_to_vmem [thread:$0]  %s0, 256, %s15, [#allocation3]
    $region5: #{tpu_custom_call.1} parent=1 // pred_fallthru
      _
    // Predicated region
    $region6: #{tpu_custom_call.1} parent=1 // pred_check
      _
    $region7: #{tpu_custom_call.1} parent=1 // pred_check_branch
      %19 = sbr.rel (0) target = $region9
    $region8: #{tpu_custom_call.1} parent=1 // pred_region
      %20 = dma.done [#allocation3], 256
    $region9: #{tpu_custom_call.1} parent=1 // pred_fallthru
      _
    %v21 = vld [vmem:[#allocation2] sm:$0xff]
    %v22 = vld [vmem:[#allocation2 + $0x8] sm:$0xff]
    %23 = vrot.lane.b32.xlu0 %v21, 37
    %v24 = vpop.permute.xlu0 %23
    %25 = vrot.lane.b32.xlu0 %v22, 37
    %v26 = vpop.permute.xlu0 %25
    %v27 = vlaneseq
    %v28 = vand.u32 %v27, 127
    %vm29 = vcmp.lt.s32.totalorder %v28, 37
    %v30 = vsel %vm29, %v24, %v26
    %v31 = vsel %vm29, %v26, %v24
    %32 = vst [vmem:[#allocation5] sm:$0xff] %v31
    %33 = vst [vmem:[#allocation5 + $0x8] sm:$0xff] %v30
    %vm34 = vcmask 302080
    %35 = vst.msk [vmem:[#allocation5 + $0x10] sm:$0xff] %vm34, %v31
    // Predicated region
    $region10: #{tpu_custom_call.1} parent=1 // pred_check
      _
    $region11: #{tpu_custom_call.1} parent=1 // pred_check_branch
      %37 = sbr.rel (0) target = $region13
    $region12: #{tpu_custom_call.1} parent=1 // pred_region
      %s39 = ssub.s32 384, 384
      %40 = vsyncadd [#allocation4], %s39
      %s42 = sshll.u32 [#allocation5], 4
      %s43 = int_to_ptr.vmem [resolvable:$true] %s42
      %45 = dma.vmem_to_hbm [thread:$0]  %s43, 384, %s1, [#allocation4]
    $region13: #{tpu_custom_call.1} parent=1 // pred_fallthru
      _
    // Predicated region
    $region14: #{tpu_custom_call.1} parent=1 // pred_check
      _
    $region15: #{tpu_custom_call.1} parent=1 // pred_check_branch
      %47 = sbr.rel (0) target = $region17
    $region16: #{tpu_custom_call.1} parent=1 // pred_region
      %48 = dma.done [#allocation4], 384
    $region17: #{tpu_custom_call.1} parent=1 // pred_fallthru
      _
    %49 = vsyncpa [#allocation3], 1
    %50 = vsyncpa [#allocation4], 1

</llo_original>
